<compile_context>
chip_gen: v6e
topology: v6e:2x2x1
jax: 0.10.0
libtpu: 0.0.40
codegen_flags: <defaults>
</compile_context>

<pallas_src>
import math

import jax
import jax.numpy as jnp
from jax.experimental import pallas as pl
from jax.experimental.pallas import tpu as pltpu


def flow_kernel(xc_ref, w1_ref, b1_ref, w2_ref, b2_ref, out_ref):
    # Layer 1 (merged x / time-emb matmul, emb_layer folded into the weights):
    #   h1 = tanh([x, time_emb] @ W1m + b1')
    h1 = jnp.tanh(
        jnp.dot(xc_ref[...], w1_ref[...], preferred_element_type=jnp.float32)
        + b1_ref[...])                                                # (TB, H1) f32

    # Layer 2 (no activation); output columns are lane-padded to a multiple of 128.
    out_ref[...] = (
        jnp.dot(h1.astype(jnp.bfloat16), w2_ref[...],
                preferred_element_type=jnp.float32)
        + b2_ref[...])                                                # (TB, DOUT_P) f32


def _round_up(n, m):
    return ((n + m - 1) // m) * m


def timestep_embedding_pi(t, dim, max_period=10000.0):
    """JAX port of the PyTorch timestep_embedding_pi (computed in the wrapper)."""
    half = dim // 2
    freqs = (jnp.exp(-math.log(max_period)
                     * jnp.arange(half, dtype=jnp.float32) / half) * 2.0 * math.pi)
    args = t[:, None].astype(jnp.float32) * freqs[None]
    emb = jnp.concatenate([jnp.cos(args), jnp.sin(args)], axis=-1)
    if dim % 2:
        emb = jnp.concatenate([emb, jnp.zeros_like(emb[:, :1])], axis=-1)
    return emb


def flow_model_forward(x, t, params, time_emb_dim, *, max_batch_tile=2048):
    """x: (B, Dx) float32, t: (B,) float32.

    params = (we, be, w1x, w1e, b1, w2, b2) with linear weights stored as
    (in_features, out_features) and biases as (1, out_features).
    """
    B, Dx = x.shape
    we, be, w1x, w1e, b1, w2, b2 = params

    # --- timestep embedding in the wrapper (frees the kernel's EUP for tanh) ---
    time_emb = timestep_embedding_pi(t, time_emb_dim)                 # (B, TE)
    te = time_emb.shape[1]

    # --- fold emb_layer into MLP layer 1 (exact) and merge into ONE matmul ---
    wte = we @ w1e                                                     # (TE, H1)
    w1m = jnp.concatenate([w1x, wte], axis=0).astype(jnp.bfloat16)     # (Dx+TE, H1)
    b1f = (be @ w1e + b1).astype(jnp.float32)                          # (1, H1)

    H1, Dout = w2.shape
    # --- lane-dense output: pad final layer to a multiple of 128 columns ---
    dout_p = _round_up(max(Dout, 128), 128)
    if dout_p != Dout:
        w2p = jnp.zeros((H1, dout_p), jnp.float32).at[:, :Dout].set(w2)
        b2p = jnp.zeros((1, dout_p), jnp.float32).at[:, :Dout].set(b2)
    else:
        w2p, b2p = w2.astype(jnp.float32), b2.astype(jnp.float32)
    w2p = w2p.astype(jnp.bfloat16)
    b2p = b2p.astype(jnp.float32)

    # --- fused activation input [x, time_emb], bf16 for the MXU ---
    xc = jnp.concatenate([x.astype(jnp.float32), time_emb],
                         axis=-1).astype(jnp.bfloat16)                 # (B, Dx+TE)
    K = Dx + te

    # --- balanced batch tiles; >= 2 grid steps when possible (v7x megacore) ---
    n_tiles = max(pl.cdiv(B, max_batch_tile), 2)
    tb = _round_up(pl.cdiv(B, n_tiles), 8)
    bp = _round_up(B, tb)
    if bp != B:
        xc = jnp.pad(xc, ((0, bp - B), (0, 0)))
    grid = (bp // tb,)

    resident = lambda shape: pl.BlockSpec(shape, lambda i: (0, 0))

    out = pl.pallas_call(
        flow_kernel,
        out_shape=jax.ShapeDtypeStruct((bp, dout_p), jnp.float32),
        grid=grid,
        in_specs=[
            pl.BlockSpec((tb, K), lambda i: (i, 0)),    # [x, time_emb] (batch-tiled)
            resident((K, H1)),                          # merged W1 (bf16)
            resident((1, H1)),                          # folded b1 (f32)
            resident((H1, dout_p)),                     # W2 (bf16, lane-padded)
            resident((1, dout_p)),                      # b2 (f32, lane-padded)
        ],
        out_specs=pl.BlockSpec((tb, dout_p), lambda i: (i, 0)),
        compiler_params=pltpu.CompilerParams(
            dimension_semantics=("parallel",)),
    )(xc, w1m, b1f, w2p, b2p)

    return out[:B, :Dout]


def make_params(key, dims, time_emb_dim):
    """Xavier-normal weights (RecBole xavier_normal_initialization style).

    dims is the ORIGINAL dims list; dims[0] gets += time_emb_dim inside the
    model (time_type='cat').  Biases are given small random values here purely
    to exercise the bias-fold path numerically.
    """
    Dx = dims[0]
    d_in0 = Dx + time_emb_dim          # after cat
    H1 = dims[1]
    Dout = dims[2]

    def xavier(k, fan_in, fan_out):
        std = math.sqrt(2.0 / (fan_in + fan_out))
        return jax.random.normal(k, (fan_in, fan_out), dtype=jnp.float32) * std

    k_emb, k_w1, k_w2, k_b0, k_b1, k_b2 = jax.random.split(key, 6)

    # emb_layer: Linear(time_emb_dim, time_emb_dim); stored as (in, out)
    we = xavier(k_emb, time_emb_dim, time_emb_dim)
    be = 0.01 * jax.random.normal(k_b0, (1, time_emb_dim), dtype=jnp.float32)

    # MLP layer 1: Linear(Dx + time_emb, H1); split along input dim
    w1 = xavier(k_w1, d_in0, H1)
    w1x = w1[:Dx, :]
    w1e = w1[Dx:, :]
    b1 = 0.01 * jax.random.normal(k_b1, (1, H1), dtype=jnp.float32)

    # MLP layer 2: Linear(H1, Dout)
    w2 = xavier(k_w2, H1, Dout)
    b2 = 0.01 * jax.random.normal(k_b2, (1, Dout), dtype=jnp.float32)

    return (we, be, w1x, w1e, b1, w2, b2)


def reference_forward(x, t, params, time_emb_dim):
    """Pure-JAX f32 reference mirroring the PyTorch forward (eval mode)."""
    time_emb = timestep_embedding_pi(t, time_emb_dim)
    we, be, w1x, w1e, b1, w2, b2 = params
    emb = time_emb @ we + be
    h = jnp.concatenate([x, emb], axis=-1)
    w1 = jnp.concatenate([w1x, w1e], axis=0)
    h1 = jnp.tanh(h @ w1 + b1)
    return h1 @ w2 + b2


if __name__ == "__main__":
    # Small shapes: dims=[64, 32, 64], time_emb_size=8, batch=8
    dims = [64, 32, 64]
    time_emb_dim = 8
    B = 8

    key = jax.random.PRNGKey(0)
    k_params, k_x, k_t = jax.random.split(key, 3)
    params = make_params(k_params, dims, time_emb_dim)

    x = jax.random.normal(k_x, (B, dims[0]), dtype=jnp.float32)
    t = jax.random.uniform(k_t, (B,), dtype=jnp.float32)   # continuous flow time in [0,1)

    out = flow_model_forward(x, t, params, time_emb_dim)
    out = jax.block_until_ready(out)

    ref = reference_forward(x, t, params, time_emb_dim)
    assert out.shape == (B, dims[-1])
    # Tolerance loosened vs. pure-f32 reference because matmul operands are bf16
    # (accumulation stays f32 via preferred_element_type).
    assert jnp.allclose(out, ref, atol=5e-2, rtol=5e-2), "mismatch vs reference"

    # TODO(synk): dropout (init_dropout / MLP dropout=0.1) and norm=True F.normalize
    # are identity / unused here (eval mode, default norm=False).
    print("KERNEL_OK")
</pallas_src>

<mosaic_0001>
module attributes {stable_mosaic.version = 11 : i64} {
  func.func @flow_kernel(%arg0: i32, %arg1: memref<8x72xbf16, #tpu.memory_space<vmem>>, %arg2: memref<72x32xbf16, #tpu.memory_space<vmem>>, %arg3: memref<1x32xf32, #tpu.memory_space<vmem>>, %arg4: memref<32x128xbf16, #tpu.memory_space<vmem>>, %arg5: memref<1x128xf32, #tpu.memory_space<vmem>>, %arg6: memref<8x128xf32, #tpu.memory_space<vmem>>) attributes {dimension_semantics = [#tpu.dimension_semantics<parallel>], iteration_bounds = array<i64: 1>, scalar_prefetch = 0 : i64, scratch_operands = 0 : i64, tpu.core_type = #tpu.core_type<tc>, window_params = [{transform_indices = @transform_0, window_bounds = array<i64: 8, 72>}, {pipeline_mode = #tpu.pipeline_mode<synchronous>, transform_indices = @transform_1, window_bounds = array<i64: 72, 32>}, {pipeline_mode = #tpu.pipeline_mode<synchronous>, transform_indices = @transform_2, window_bounds = array<i64: 1, 32>}, {pipeline_mode = #tpu.pipeline_mode<synchronous>, transform_indices = @transform_3, window_bounds = array<i64: 32, 128>}, {pipeline_mode = #tpu.pipeline_mode<synchronous>, transform_indices = @transform_4, window_bounds = array<i64: 1, 128>}, {transform_indices = @transform_5, window_bounds = array<i64: 8, 128>}]} {
    %c0 = arith.constant 0 : index
    %c0_0 = arith.constant 0 : index
    %0 = vector.load %arg1[%c0, %c0_0] : memref<8x72xbf16, #tpu.memory_space<vmem>>, vector<8x72xbf16>
    %c0_1 = arith.constant 0 : index
    %c0_2 = arith.constant 0 : index
    %1 = vector.load %arg2[%c0_1, %c0_2] : memref<72x32xbf16, #tpu.memory_space<vmem>>, vector<72x32xbf16>
    %cst = arith.constant dense<0.000000e+00> : vector<8x32xf32>
    %2 = tpu.matmul %0, %1, %cst {dimension_numbers = #tpu.dot_dimension_numbers<[1], [0], [0], [1], [0, 0, 1, 1], [], []>} : vector<8x72xbf16>, vector<72x32xbf16>, vector<8x32xf32> -> vector<8x32xf32>
    %c0_3 = arith.constant 0 : index
    %c0_4 = arith.constant 0 : index
    %3 = vector.load %arg3[%c0_3, %c0_4] : memref<1x32xf32, #tpu.memory_space<vmem>>, vector<1x32xf32>
    %4 = vector.broadcast %3 : vector<1x32xf32> to vector<8x32xf32>
    %5 = arith.addf %2, %4 : vector<8x32xf32>
    %6 = math.tanh %5 : vector<8x32xf32>
    %7 = arith.truncf %6 : vector<8x32xf32> to vector<8x32xbf16>
    %c0_5 = arith.constant 0 : index
    %c0_6 = arith.constant 0 : index
    %8 = vector.load %arg4[%c0_5, %c0_6] : memref<32x128xbf16, #tpu.memory_space<vmem>>, vector<32x128xbf16>
    %cst_7 = arith.constant dense<0.000000e+00> : vector<8x128xf32>
    %9 = tpu.matmul %7, %8, %cst_7 {dimension_numbers = #tpu.dot_dimension_numbers<[1], [0], [0], [1], [0, 0, 1, 1], [], []>} : vector<8x32xbf16>, vector<32x128xbf16>, vector<8x128xf32> -> vector<8x128xf32>
    %c0_8 = arith.constant 0 : index
    %c0_9 = arith.constant 0 : index
    %10 = vector.load %arg5[%c0_8, %c0_9] : memref<1x128xf32, #tpu.memory_space<vmem>>, vector<1x128xf32>
    %11 = vector.broadcast %10 : vector<1x128xf32> to vector<8x128xf32>
    %12 = arith.addf %9, %11 : vector<8x128xf32>
    %c0_10 = arith.constant 0 : index
    %c0_11 = arith.constant 0 : index
    %13 = vector.load %arg6[%c0_10, %c0_11] : memref<8x128xf32, #tpu.memory_space<vmem>>, vector<8x128xf32>
    tpu.vector_store %arg6[%c0_10, %c0_11], %12 {strides = array<i32>} : memref<8x128xf32, #tpu.memory_space<vmem>>, vector<8x128xf32>,
    return
  }
  func.func @transform_0(%arg0: i32) -> (i32, i32) {
    %c0_i32 = arith.constant 0 : i32
    %c0_i32_0 = arith.constant 0 : i32
    return %arg0, %c0_i32 : i32, i32
  }
  func.func @transform_1(%arg0: i32) -> (i32, i32) {
    %c0_i32 = arith.constant 0 : i32
    %c0_i32_0 = arith.constant 0 : i32
    %c0_i32_1 = arith.constant 0 : i32
    return %c0_i32, %c0_i32_0 : i32, i32
  }
  func.func @transform_2(%arg0: i32) -> (i32, i32) {
    %c0_i32 = arith.constant 0 : i32
    %c0_i32_0 = arith.constant 0 : i32
    %c0_i32_1 = arith.constant 0 : i32
    return %c0_i32, %c0_i32_0 : i32, i32
  }
  func.func @transform_3(%arg0: i32) -> (i32, i32) {
    %c0_i32 = arith.constant 0 : i32
    %c0_i32_0 = arith.constant 0 : i32
    %c0_i32_1 = arith.constant 0 : i32
    return %c0_i32, %c0_i32_0 : i32, i32
  }
  func.func @transform_4(%arg0: i32) -> (i32, i32) {
    %c0_i32 = arith.constant 0 : i32
    %c0_i32_0 = arith.constant 0 : i32
    %c0_i32_1 = arith.constant 0 : i32
    return %c0_i32, %c0_i32_0 : i32, i32
  }
  func.func @transform_5(%arg0: i32) -> (i32, i32) {
    %c0_i32 = arith.constant 0 : i32
    %c0_i32_0 = arith.constant 0 : i32
    return %arg0, %c0_i32 : i32, i32
  }
}

</mosaic_0001>

<llo_original>
// kernel: tpu_custom_call.1
$region0: #{tpu_custom_call.1}
  #allocation0 [shape = 'u32[]', space=smem, size = 0x4, offset = 0x4, fixed_abs, tag = 'smem constant byte address 0x4 - core index']
  #allocation1 [shape = 'u32[144,128]{1,0:T(1,128)}', space=vmem, size = 0x12000, scoped, tag = 'internal scratch']
  %s0 = inlined_call_operand.vmem [shape: bf16[8,72], index: 0, kind: input, shape index: {}]
  %s1 = inlined_call_operand.vmem [shape: bf16[72,32], index: 1, kind: input, shape index: {}]
  %s2 = inlined_call_operand.vmem [shape: f32[1,32], index: 2, kind: input, shape index: {}]
  %s3 = inlined_call_operand.vmem [shape: bf16[32,128], index: 3, kind: input, shape index: {}]
  %s4 = inlined_call_operand.vmem [shape: f32[1,128], index: 4, kind: input, shape index: {}]
  %s5 = inlined_call_operand.hbm [shape: f32[8,128], index: 5, kind: output, shape index: {}]
  %s6 = sld [smem:[#allocation0]]
  $region30: #{tpu_custom_call.1} parent=0
    _
  %s8 = ssub.s32 1, %s6
  %s9 = scalar_select 0, %s8, %s6
  $region1: #{tpu_custom_call.1} parent=0
    #allocation2 [shape = 'u8[4096]{0}', space=vmem, size = 0x1000, scoped, tag = 'output window, operand 0, single buffered']
    #allocation3 [shape = 's32[1]{0}', space=sflag, size = 0x4, scoped, tag = 'scoped memory for tpu_custom_call.1']
    %10 = vsyncpa [#allocation3], 0
    // Predicated region
    $region2: #{tpu_custom_call.1} parent=1 // pred_check
      _
    $region3: #{tpu_custom_call.1} parent=1 // pred_check_branch
      %12 = sbr.rel (0) target = $region5
    $region4: #{tpu_custom_call.1} parent=1 // pred_region
      _
    $region5: #{tpu_custom_call.1} parent=1 // pred_fallthru
      _
    // Predicated region
    $region6: #{tpu_custom_call.1} parent=1 // pred_check
      _
    $region7: #{tpu_custom_call.1} parent=1 // pred_check_branch
      %14 = sbr.rel (0) target = $region9
    $region8: #{tpu_custom_call.1} parent=1 // pred_region
      _
    $region9: #{tpu_custom_call.1} parent=1 // pred_fallthru
      _
    // Predicated region
    $region10: #{tpu_custom_call.1} parent=1 // pred_check
      _
    $region11: #{tpu_custom_call.1} parent=1 // pred_check_branch
      %16 = sbr.rel (0) target = $region13
    $region12: #{tpu_custom_call.1} parent=1 // pred_region
      _
    $region13: #{tpu_custom_call.1} parent=1 // pred_fallthru
      _
    // Predicated region
    $region14: #{tpu_custom_call.1} parent=1 // pred_check
      _
    $region15: #{tpu_custom_call.1} parent=1 // pred_check_branch
      %18 = sbr.rel (0) target = $region17
    $region16: #{tpu_custom_call.1} parent=1 // pred_region
      _
    $region17: #{tpu_custom_call.1} parent=1 // pred_fallthru
      _
    // Predicated region
    $region18: #{tpu_custom_call.1} parent=1 // pred_check
      _
    $region19: #{tpu_custom_call.1} parent=1 // pred_check_branch
      %20 = sbr.rel (0) target = $region21
    $region20: #{tpu_custom_call.1} parent=1 // pred_region
      _
    $region21: #{tpu_custom_call.1} parent=1 // pred_fallthru
      _
    %v22 = vld [vmem:[%s0] sm:$0xf]
    %v23 = vld [vmem:[%s1] sm:$0xf]
    %v24 = vld [vmem:[%s1 + $0x4] sm:$0xf]
    %v25 = vld [vmem:[%s1 + $0x8] sm:$0xf]
    %v26 = vld [vmem:[%s1 + $0xc] sm:$0xf]
    %v27 = vld [vmem:[%s1 + $0x10] sm:$0xf]
    %v28 = vld [vmem:[%s1 + $0x14] sm:$0xf]
    %v29 = vld [vmem:[%s1 + $0x18] sm:$0xf]
    %v30 = vld [vmem:[%s1 + $0x1c] sm:$0xf]
    %v31 = vld [vmem:[%s1 + $0x20] sm:$0xf]
    %v32 = vld [vmem:[%s2] sm:$0x1]
    %v34 = vlaneseq
    %v35 = vshrl.u32 %v34, 7
    %v36 = vsub.s32 0, %v35
    %v37 = vrot.slane %v32, %v36
    %v48 = vunpack.c.l.b16 %v23
    %v49 = vunpack.c.l.b16 %v24
    %v50 = vunpack.c.l.b16 %v25
    %v51 = vunpack.c.l.b16 %v26
    %v52 = vunpack.c.l.b16 %v27
    %v53 = vunpack.c.l.b16 %v28
    %v54 = vunpack.c.l.b16 %v29
    %v55 = vunpack.c.l.b16 %v30
    %v56 = vunpack.c.l.b16 %v31
    %v57 = vpack.c.b16 %v49, %v48
    %v58 = vpack.c.b16 %v51, %v50
    %v59 = vpack.c.b16 %v53, %v52
    %v60 = vpack.c.b16 %v55, %v54
    %v61 = vpack.c.b16 %v56, %v56
    %vm66 = vcmask 588800
    %v68 = vsel %vm66, %v22, 0
    %vm70 = vcmask 1043456
    %v72 = vsel %vm70, %v61, 0
    %74 = vmatprep.subr.bf16.mxu0 0
    %75 = vmatpush1.bf16.msra.mxu0 0
    %76 = vmatprep.subr.bf16.mxu0 0
    %77 = vmatpush1.bf16.msra.mxu0 0
    %78 = vmatprep.subr.bf16.mxu0 0
    %79 = vmatpush1.bf16.msra.mxu0 0
    %80 = vmatprep.subr.bf16.mxu0 0
    %81 = vmatpush1.bf16.msra.mxu0 %v72
    %82 = vmatprep.subr.bf16.mxu0 0
    %83 = vmatpush1.bf16.msra.mxu0 %v60
    %84 = vmatprep.subr.bf16.mxu0 0
    %85 = vmatpush1.bf16.msra.mxu0 %v59
    %86 = vmatprep.subr.bf16.mxu0 0
    %87 = vmatpush1.bf16.msra.mxu0 %v58
    %88 = vmatprep.subr.bf16.mxu0 0
    %89 = vmatpush1.bf16.msra.mxu0 %v57
    %90 = vmatprep.subr.bf16.mxu0 0
    %91 = vmatpush2.bf16.msra.mxu0 0
    %92 = vmatprep.subr.bf16.mxu0 0
    %93 = vmatpush2.bf16.msra.mxu0 0
    %94 = vmatprep.subr.bf16.mxu0 0
    %95 = vmatpush2.bf16.msra.mxu0 0
    %96 = vmatprep.subr.bf16.mxu0 0
    %97 = vmatpush2.bf16.msra.mxu0 0
    %98 = vmatprep.subr.bf16.mxu0 0
    %99 = vmatpush2.bf16.msra.mxu0 0
    %100 = vmatprep.subr.bf16.mxu0 0
    %101 = vmatpush2.bf16.msra.mxu0 0
    %102 = vmatprep.subr.bf16.mxu0 0
    %103 = vmatpush2.bf16.msra.mxu0 0
    %104 = vmatprep.subr.bf16.mxu0 0
    %105 = vmatpush2.bf16.msra.mxu0 0
    %106 = vmatprep.mubr.bf16.mxu0 0
    %107 = vmatmul.mubr.bf16.gmra.mxu0 %v68
    %v108 = vpop.f32.mrf.mxu0
    %v109 = vadd.f32 %v37, %v108
    %v110 = vpop.f32.mrf.mxu0
    %v111 = vpop.f32.mrf.mxu0
    %v112 = vpop.f32.mrf.mxu0
    %113 = vdwg.mxu0
    %v114 = vtanh.pop %v109
    %v115 = vpack.c.bf16 %v114, %v114
    %v116 = vld [vmem:[%s3] sm:$0xf]
    %v117 = vld [vmem:[%s3 + $0x4] sm:$0xf]
    %v118 = vld [vmem:[%s3 + $0x8] sm:$0xf]
    %v119 = vld [vmem:[%s3 + $0xc] sm:$0xf]
    %v120 = vld [vmem:[%s4] sm:$0x1]
    %v122 = vlaneseq
    %v123 = vshrl.u32 %v122, 7
    %v124 = vsub.s32 0, %v123
    %v125 = vrot.slane %v120, %v124
    %v131 = vunpack.c.l.b16 %v116
    %v132 = vunpack.c.l.b16 %v117
    %v133 = vunpack.c.l.b16 %v118
    %v134 = vunpack.c.l.b16 %v119
    %v135 = vpack.c.b16 %v132, %v131
    %v136 = vpack.c.b16 %v134, %v133
    %vm139 = vcmask 261120
    %v141 = vsel %vm139, %v115, 0
    %143 = vmatprep.subr.bf16.mxu0 0
    %144 = vmatpush1.bf16.msra.mxu0 0
    %145 = vmatprep.subr.bf16.mxu0 0
    %146 = vmatpush1.bf16.msra.mxu0 0
    %147 = vmatprep.subr.bf16.mxu0 0
    %148 = vmatpush1.bf16.msra.mxu0 0
    %149 = vmatprep.subr.bf16.mxu0 0
    %150 = vmatpush1.bf16.msra.mxu0 0
    %151 = vmatprep.subr.bf16.mxu0 0
    %152 = vmatpush1.bf16.msra.mxu0 0
    %153 = vmatprep.subr.bf16.mxu0 0
    %154 = vmatpush1.bf16.msra.mxu0 0
    %155 = vmatprep.subr.bf16.mxu0 0
    %156 = vmatpush1.bf16.msra.mxu0 %v136
    %157 = vmatprep.subr.bf16.mxu0 0
    %158 = vmatpush1.bf16.msra.mxu0 %v135
    %159 = vmatprep.subr.bf16.mxu0 0
    %160 = vmatpush2.bf16.msra.mxu0 0
    %161 = vmatprep.subr.bf16.mxu0 0
    %162 = vmatpush2.bf16.msra.mxu0 0
    %163 = vmatprep.subr.bf16.mxu0 0
    %164 = vmatpush2.bf16.msra.mxu0 0
    %165 = vmatprep.subr.bf16.mxu0 0
    %166 = vmatpush2.bf16.msra.mxu0 0
    %167 = vmatprep.subr.bf16.mxu0 0
    %168 = vmatpush2.bf16.msra.mxu0 0
    %169 = vmatprep.subr.bf16.mxu0 0
    %170 = vmatpush2.bf16.msra.mxu0 0
    %171 = vmatprep.subr.bf16.mxu0 0
    %172 = vmatpush2.bf16.msra.mxu0 0
    %173 = vmatprep.subr.bf16.mxu0 0
    %174 = vmatpush2.bf16.msra.mxu0 0
    %175 = vmatprep.mubr.bf16.mxu0 0
    %176 = vmatmul.mubr.bf16.gmra.mxu0 %v141
    %v177 = vpop.f32.mrf.mxu0
    %v178 = vadd.f32 %v125, %v177
    %v179 = vpop.f32.mrf.mxu0
    %v180 = vpop.f32.mrf.mxu0
    %v181 = vpop.f32.mrf.mxu0
    %182 = vdwg.mxu0
    %183 = vst [vmem:[#allocation2] sm:$0xff] %v178
    // Predicated region
    $region22: #{tpu_custom_call.1} parent=1 // pred_check
      _
    $region23: #{tpu_custom_call.1} parent=1 // pred_check_branch
      %185 = sbr.rel (0) target = $region25
    $region24: #{tpu_custom_call.1} parent=1 // pred_region
      %s187 = ssub.s32 128, 128
      %188 = vsyncadd [#allocation3], %s187
      %s190 = sshll.u32 [#allocation2], 4
      %s191 = int_to_ptr.vmem [resolvable:$true] %s190
      %193 = dma.vmem_to_hbm [thread:$0]  %s191, 128, %s5, [#allocation3]
    $region25: #{tpu_custom_call.1} parent=1 // pred_fallthru
      _
    // Predicated region
    $region26: #{tpu_custom_call.1} parent=1 // pred_check
      _
    $region27: #{tpu_custom_call.1} parent=1 // pred_check_branch
      %195 = sbr.rel (0) target = $region29
    $region28: #{tpu_custom_call.1} parent=1 // pred_region
      %196 = dma.done [#allocation3], 128
    $region29: #{tpu_custom_call.1} parent=1 // pred_fallthru
      _
    %197 = vsyncpa [#allocation3], 1

</llo_original>
